<compile_context>
chip_gen: v7x
topology: tpu7x:2x2x1
jax: 0.10.0
libtpu: 0.0.40
codegen_flags: <defaults>
</compile_context>

<pallas_src>
import functools
import math

import jax
import jax.numpy as jnp
from jax.experimental import pallas as pl
from jax.experimental.pallas import tpu as pltpu


LANE = 128


def _round_up(x, m):
    return (x + m - 1) // m * m


def _nbytes(shape, dtype):
    return math.prod(shape) * jnp.dtype(dtype).itemsize


def _encoder_kernel(*refs, num_layers, non_linear, use_bias, use_bf16_matmul):
    """Fused MLP forward over one batch tile.

    refs = (x_ref, w0, [b0], w1, [b1], ..., w_{L-1}, [b_{L-1}], out_ref)
    All layer matmuls + bias adds + ReLUs happen here (MXU + VPU).
    """
    x_ref = refs[0]
    out_ref = refs[-1]
    param_refs = refs[1:-1]
    per_layer = 2 if use_bias else 1

    h = x_ref[...]  # bf16 stream when use_bf16_matmul, else f32
    if not use_bf16_matmul:
        h = h.astype(jnp.float32)

    for layer in range(num_layers):
        w = param_refs[layer * per_layer][...]  # resident in VMEM across grid steps
        if use_bf16_matmul:
            h = jnp.dot(
                h.astype(jnp.bfloat16), w, preferred_element_type=jnp.float32
            )
        else:
            # Exact-f32 path (multi-pass on the MXU); only taken when requested.
            h = jnp.dot(
                h, w,
                preferred_element_type=jnp.float32,
                precision=jax.lax.Precision.HIGHEST,
            )
        if use_bias:
            b = param_refs[layer * per_layer + 1][...]  # (1, out) f32
            h = h + b  # broadcasts over batch rows (VPU)
        if non_linear and layer < num_layers - 1:
            h = jnp.maximum(h, 0.0)

    out_ref[...] = h.astype(out_ref.dtype)


def encoder_forward(x, weights, biases, *, non_linear, use_bias,
                    use_bf16_matmul=True, tile_b=2048):
    """Tiles the batch and calls the fused kernel; features stay narrow in HBM."""
    B, D_in = x.shape
    num_layers = len(weights)
    z_dim = weights[-1].shape[1]

    dims = [w.shape[0] for w in weights] + [z_dim]
    assert dims[0] == D_in, "first weight must match input feature dim"

    # Per-layer padded output widths: hidden layers lane-dense (128), the final
    # layer keeps z_dim so the HBM writeback is exactly (B_pad, z_dim).
    pout = [_round_up(d, LANE) for d in dims[1:-1]] + [z_dim]
    pin = [D_in] + pout[:-1]

    stream_dtype = jnp.bfloat16 if use_bf16_matmul else jnp.float32
    w_dtype = stream_dtype

    # Dtype-aware sublane rounding: bf16 min tile is (16, 128), f32 is (8, 128).
    sublane = 16 if use_bf16_matmul else 8

    # Batch tiling: clamp to padded batch, prefer >= 2 grid steps (megacore/v7x).
    tile_b = max(sublane, min(tile_b, _round_up(B, sublane)))
    if _round_up(B, sublane) > sublane and tile_b >= _round_up(B, sublane):
        tile_b = min(tile_b, _round_up(-(-B // 2), sublane))
    tile_b = _round_up(tile_b, sublane)
    B_pad = _round_up(B, tile_b)
    grid = (B_pad // tile_b,)

    # Input stays lane-narrow (D_in) in HBM; only the batch is padded (+cast).
    if B_pad == B and x.dtype == stream_dtype:
        x_p = x
    else:
        x_p = jnp.zeros((B_pad, D_in), stream_dtype).at[:B].set(
            x.astype(stream_dtype))

    args = [x_p]
    in_specs = [pl.BlockSpec((tile_b, D_in), lambda i: (i, 0))]
    for li in range(num_layers):
        w = weights[li]
        w_p = (
            jnp.zeros((pin[li], pout[li]), w_dtype)
            .at[: w.shape[0], : w.shape[1]]
            .set(w.astype(w_dtype))
        )
        args.append(w_p)
        # Same block every grid step -> weight stays resident in VMEM.
        in_specs.append(pl.BlockSpec(w_p.shape, lambda i: (0, 0)))
        if use_bias:
            b = biases[li].astype(jnp.float32)
            b_p = jnp.zeros((1, pout[li]), jnp.float32).at[0, : b.shape[0]].set(b)
            args.append(b_p)
            in_specs.append(pl.BlockSpec(b_p.shape, lambda i: (0, 0)))

    out_dtype = x.dtype
    out_specs = pl.BlockSpec((tile_b, z_dim), lambda i: (i, 0))
    out_shape = jax.ShapeDtypeStruct((B_pad, z_dim), out_dtype)

    # VMEM budget: double-buffered x/out tiles + params (conservatively 2x) +
    # f32 activation headroom at the widest hidden layer.
    budget = 2 * _nbytes((tile_b, D_in), stream_dtype)
    budget += 2 * _nbytes((tile_b, z_dim), out_dtype)
    for a in args[1:]:
        budget += 2 * _nbytes(a.shape, a.dtype)
    budget += 3 * tile_b * max(pout + [D_in]) * 4

    # Generation-aware VMEM cap: leave ~25% headroom for Mosaic scratch, and
    # never under-provision relative to the computed budget.
    try:
        vmem_cap = int(getattr(pltpu.get_tpu_info(), "vmem_capacity_bytes",
                               64 * 1024 * 1024))
    except Exception:
        vmem_cap = 64 * 1024 * 1024
    vmem_limit = max(32 * 1024 * 1024, int(budget * 2))
    vmem_limit = min(vmem_limit, (vmem_cap * 3) // 4)
    vmem_limit = max(vmem_limit, int(budget * 1.25))

    # Advisory cost estimate (real flops on padded matmuls, real HBM bytes).
    flops = 2 * B_pad * sum(pin[li] * pout[li] for li in range(num_layers))
    bytes_accessed = (_nbytes((B_pad, D_in), stream_dtype)
                      + _nbytes((B_pad, z_dim), out_dtype)
                      + sum(_nbytes(a.shape, a.dtype) for a in args[1:]))
    cost = pl.CostEstimate(flops=flops, transcendentals=0,
                           bytes_accessed=bytes_accessed)

    kernel = functools.partial(
        _encoder_kernel,
        num_layers=num_layers,
        non_linear=non_linear,
        use_bias=use_bias,
        use_bf16_matmul=use_bf16_matmul,
    )

    out_padded = pl.pallas_call(
        kernel,
        out_shape=out_shape,
        grid=grid,
        in_specs=in_specs,
        out_specs=out_specs,
        compiler_params=pltpu.CompilerParams(
            dimension_semantics=("parallel",),  # shard batch tiles across TCs (v7x)
            vmem_limit_bytes=vmem_limit,
        ),
        cost_estimate=cost,
    )(*args)

    # Only the batch padding needs stripping; lanes are already exactly z_dim.
    return out_padded[:B] if B_pad != B else out_padded


def reference_forward(x, weights, biases, *, non_linear, use_bias,
                      use_bf16_matmul=True):
    """Pure-JAX reference mirroring the kernel's dtype choices."""
    cd = jnp.bfloat16 if use_bf16_matmul else jnp.float32
    h = x.astype(jnp.float32)
    n = len(weights)
    for i, w in enumerate(weights):
        h = jnp.dot(h.astype(cd), w.astype(cd), preferred_element_type=jnp.float32)
        if use_bias:
            h = h + biases[i].astype(jnp.float32)
        if non_linear and i < n - 1:
            h = jnp.maximum(h, 0.0)
    return h.astype(x.dtype)


if __name__ == "__main__":
    # Module config (mirrors Encoder.__init__):
    #   input_dim=32, hidden_layer_dim=[64, 32], z_dim=16, non_linear=True, bias=True
    input_dim = 32
    hidden_layer_dim = [64, 32]
    z_dim = 16
    non_linear = True
    use_bias = True
    batch = 40          # non-multiple of the tile to exercise batch padding
    test_tile_b = 16    # small tile so this toy run has a multi-step grid

    layer_sizes = [input_dim] + hidden_layer_dim + [z_dim]

    key = jax.random.PRNGKey(0)
    key, kx = jax.random.split(key)
    x = jax.random.normal(kx, (batch, input_dim), dtype=jnp.float32)

    weights = []
    biases = []
    for d_in, d_out in zip(layer_sizes[:-1], layer_sizes[1:]):
        key, kw, kb = jax.random.split(key, 3)
        # Deterministic synthetic init (Kaiming-uniform-like scale), stored as
        # (in, out) i.e. PyTorch weight (out, in) transposed.
        bound = 1.0 / jnp.sqrt(jnp.float32(d_in))
        w = jax.random.uniform(kw, (d_in, d_out), jnp.float32, -bound, bound)
        b = jax.random.uniform(kb, (d_out,), jnp.float32, -bound, bound)
        weights.append(w)
        biases.append(b)

    out = encoder_forward(
        x, weights, biases,
        non_linear=non_linear, use_bias=use_bias,
        use_bf16_matmul=True, tile_b=test_tile_b,
    )
    out = jax.block_until_ready(out)

    ref = reference_forward(
        x, weights, biases,
        non_linear=non_linear, use_bias=use_bias, use_bf16_matmul=True,
    )
    assert out.shape == (batch, z_dim)
    assert jnp.allclose(out, ref, atol=5e-3, rtol=5e-3), \
        "Pallas output mismatch vs reference"

    print("KERNEL_OK")
</pallas_src>

<mosaic_0001>
module attributes {stable_mosaic.version = 11 : i64} {
  func.func @_encoder_kernel(%arg0: i32, %arg1: memref<16x32xbf16, #tpu.memory_space<vmem>>, %arg2: memref<32x128xbf16, #tpu.memory_space<vmem>>, %arg3: memref<1x128xf32, #tpu.memory_space<vmem>>, %arg4: memref<128x128xbf16, #tpu.memory_space<vmem>>, %arg5: memref<1x128xf32, #tpu.memory_space<vmem>>, %arg6: memref<128x16xbf16, #tpu.memory_space<vmem>>, %arg7: memref<1x16xf32, #tpu.memory_space<vmem>>, %arg8: memref<16x16xf32, #tpu.memory_space<vmem>>) attributes {dimension_semantics = [#tpu.dimension_semantics<parallel>], iteration_bounds = array<i64: 3>, scalar_prefetch = 0 : i64, scratch_operands = 0 : i64, tpu.core_type = #tpu.core_type<tc>, window_params = [{transform_indices = @transform_0, window_bounds = array<i64: 16, 32>}, {pipeline_mode = #tpu.pipeline_mode<synchronous>, transform_indices = @transform_1, window_bounds = array<i64: 32, 128>}, {pipeline_mode = #tpu.pipeline_mode<synchronous>, transform_indices = @transform_2, window_bounds = array<i64: 1, 128>}, {pipeline_mode = #tpu.pipeline_mode<synchronous>, transform_indices = @transform_3, window_bounds = array<i64: 128, 128>}, {pipeline_mode = #tpu.pipeline_mode<synchronous>, transform_indices = @transform_4, window_bounds = array<i64: 1, 128>}, {pipeline_mode = #tpu.pipeline_mode<synchronous>, transform_indices = @transform_5, window_bounds = array<i64: 128, 16>}, {pipeline_mode = #tpu.pipeline_mode<synchronous>, transform_indices = @transform_6, window_bounds = array<i64: 1, 16>}, {transform_indices = @transform_7, window_bounds = array<i64: 16, 16>}]} {
    %c0 = arith.constant 0 : index
    %c0_0 = arith.constant 0 : index
    %0 = vector.load %arg1[%c0, %c0_0] : memref<16x32xbf16, #tpu.memory_space<vmem>>, vector<16x32xbf16>
    %c0_1 = arith.constant 0 : index
    %c0_2 = arith.constant 0 : index
    %1 = vector.load %arg2[%c0_1, %c0_2] : memref<32x128xbf16, #tpu.memory_space<vmem>>, vector<32x128xbf16>
    %cst = arith.constant dense<0.000000e+00> : vector<16x128xf32>
    %2 = tpu.matmul %0, %1, %cst {dimension_numbers = #tpu.dot_dimension_numbers<[1], [0], [0], [1], [0, 0, 1, 1], [], []>} : vector<16x32xbf16>, vector<32x128xbf16>, vector<16x128xf32> -> vector<16x128xf32>
    %c0_3 = arith.constant 0 : index
    %c0_4 = arith.constant 0 : index
    %3 = vector.load %arg3[%c0_3, %c0_4] : memref<1x128xf32, #tpu.memory_space<vmem>>, vector<1x128xf32>
    %4 = vector.broadcast %3 : vector<1x128xf32> to vector<16x128xf32>
    %5 = arith.addf %2, %4 : vector<16x128xf32>
    %cst_5 = arith.constant 0.000000e+00 : f32
    %6 = vector.broadcast %cst_5 : f32 to vector<16x128xf32>
    %7 = arith.maximumf %5, %6 : vector<16x128xf32>
    %c0_6 = arith.constant 0 : index
    %c0_7 = arith.constant 0 : index
    %8 = vector.load %arg4[%c0_6, %c0_7] : memref<128x128xbf16, #tpu.memory_space<vmem>>, vector<128x128xbf16>
    %9 = arith.truncf %7 : vector<16x128xf32> to vector<16x128xbf16>
    %cst_8 = arith.constant dense<0.000000e+00> : vector<16x128xf32>
    %10 = tpu.matmul %9, %8, %cst_8 {dimension_numbers = #tpu.dot_dimension_numbers<[1], [0], [0], [1], [0, 0, 1, 1], [], []>} : vector<16x128xbf16>, vector<128x128xbf16>, vector<16x128xf32> -> vector<16x128xf32>
    %c0_9 = arith.constant 0 : index
    %c0_10 = arith.constant 0 : index
    %11 = vector.load %arg5[%c0_9, %c0_10] : memref<1x128xf32, #tpu.memory_space<vmem>>, vector<1x128xf32>
    %12 = vector.broadcast %11 : vector<1x128xf32> to vector<16x128xf32>
    %13 = arith.addf %10, %12 : vector<16x128xf32>
    %cst_11 = arith.constant 0.000000e+00 : f32
    %14 = vector.broadcast %cst_11 : f32 to vector<16x128xf32>
    %15 = arith.maximumf %13, %14 : vector<16x128xf32>
    %c0_12 = arith.constant 0 : index
    %c0_13 = arith.constant 0 : index
    %16 = vector.load %arg6[%c0_12, %c0_13] : memref<128x16xbf16, #tpu.memory_space<vmem>>, vector<128x16xbf16>
    %17 = arith.truncf %15 : vector<16x128xf32> to vector<16x128xbf16>
    %cst_14 = arith.constant dense<0.000000e+00> : vector<16x16xf32>
    %18 = tpu.matmul %17, %16, %cst_14 {dimension_numbers = #tpu.dot_dimension_numbers<[1], [0], [0], [1], [0, 0, 1, 1], [], []>} : vector<16x128xbf16>, vector<128x16xbf16>, vector<16x16xf32> -> vector<16x16xf32>
    %c0_15 = arith.constant 0 : index
    %c0_16 = arith.constant 0 : index
    %19 = vector.load %arg7[%c0_15, %c0_16] : memref<1x16xf32, #tpu.memory_space<vmem>>, vector<1x16xf32>
    %20 = vector.broadcast %19 : vector<1x16xf32> to vector<16x16xf32>
    %21 = arith.addf %18, %20 : vector<16x16xf32>
    %c0_17 = arith.constant 0 : index
    %c0_18 = arith.constant 0 : index
    %22 = vector.load %arg8[%c0_17, %c0_18] : memref<16x16xf32, #tpu.memory_space<vmem>>, vector<16x16xf32>
    tpu.vector_store %arg8[%c0_17, %c0_18], %21 {strides = array<i32>} : memref<16x16xf32, #tpu.memory_space<vmem>>, vector<16x16xf32>,
    return
  }
  func.func @transform_0(%arg0: i32) -> (i32, i32) {
    %c0_i32 = arith.constant 0 : i32
    %c0_i32_0 = arith.constant 0 : i32
    return %arg0, %c0_i32 : i32, i32
  }
  func.func @transform_1(%arg0: i32) -> (i32, i32) {
    %c0_i32 = arith.constant 0 : i32
    %c0_i32_0 = arith.constant 0 : i32
    %c0_i32_1 = arith.constant 0 : i32
    return %c0_i32, %c0_i32_0 : i32, i32
  }
  func.func @transform_2(%arg0: i32) -> (i32, i32) {
    %c0_i32 = arith.constant 0 : i32
    %c0_i32_0 = arith.constant 0 : i32
    %c0_i32_1 = arith.constant 0 : i32
    return %c0_i32, %c0_i32_0 : i32, i32
  }
  func.func @transform_3(%arg0: i32) -> (i32, i32) {
    %c0_i32 = arith.constant 0 : i32
    %c0_i32_0 = arith.constant 0 : i32
    %c0_i32_1 = arith.constant 0 : i32
    return %c0_i32, %c0_i32_0 : i32, i32
  }
  func.func @transform_4(%arg0: i32) -> (i32, i32) {
    %c0_i32 = arith.constant 0 : i32
    %c0_i32_0 = arith.constant 0 : i32
    %c0_i32_1 = arith.constant 0 : i32
    return %c0_i32, %c0_i32_0 : i32, i32
  }
  func.func @transform_5(%arg0: i32) -> (i32, i32) {
    %c0_i32 = arith.constant 0 : i32
    %c0_i32_0 = arith.constant 0 : i32
    %c0_i32_1 = arith.constant 0 : i32
    return %c0_i32, %c0_i32_0 : i32, i32
  }
  func.func @transform_6(%arg0: i32) -> (i32, i32) {
    %c0_i32 = arith.constant 0 : i32
    %c0_i32_0 = arith.constant 0 : i32
    %c0_i32_1 = arith.constant 0 : i32
    return %c0_i32, %c0_i32_0 : i32, i32
  }
  func.func @transform_7(%arg0: i32) -> (i32, i32) {
    %c0_i32 = arith.constant 0 : i32
    %c0_i32_0 = arith.constant 0 : i32
    return %arg0, %c0_i32 : i32, i32
  }
}

</mosaic_0001>

<llo_original>
// kernel: tpu_custom_call.1
$region0: #{tpu_custom_call.1}
  #allocation0 [shape = 'u32[]', space=smem, size = 0x4, offset = 0x4, fixed_abs, tag = 'smem constant byte address 0x4 - core index']
  #allocation1 [shape = 'u32[144,128]{1,0:T(1,128)}', space=vmem, size = 0x12000, scoped, tag = 'internal scratch']
  %s0 = inlined_call_operand.vmem [shape: bf16[48,32], index: 0, kind: input, shape index: {}]
  %s1 = inlined_call_operand.vmem [shape: bf16[32,128], index: 1, kind: input, shape index: {}]
  %s2 = inlined_call_operand.vmem [shape: f32[1,128], index: 2, kind: input, shape index: {}]
  %s3 = inlined_call_operand.vmem [shape: bf16[128,128], index: 3, kind: input, shape index: {}]
  %s4 = inlined_call_operand.vmem [shape: f32[1,128], index: 4, kind: input, shape index: {}]
  %s5 = inlined_call_operand.vmem [shape: bf16[128,16], index: 5, kind: input, shape index: {}]
  %s6 = inlined_call_operand.vmem [shape: f32[1,16], index: 6, kind: input, shape index: {}]
  %s7 = inlined_call_operand.vmem [shape: f32[48,16], index: 7, kind: output, shape index: {}]
  %s8 = sld [smem:[#allocation0]]
  $region61: #{tpu_custom_call.1} parent=0
    _
  %s10 = ssub.s32 1, %s8
  %s11 = scalar_select 0, %s10, %s8
  loop: start=0, step=1, limit=5
  $region2: #{tpu_custom_call.1} parent=0 // loop_pre_header
    _
  $region3: #{tpu_custom_call.1} parent=0 // loop_header
    %s13 = sphi 0, %s17
    %p14 = scmp.ge.s32.totalorder %s13, 5
    %s23 = sphi 0, %s25
    %s26 = sphi 0, %s23
    %s27 = sphi 0, %s26
    %s43 = sphi 0, %s27
    %s47 = sphi 0, %s47
    %s49 = sphi 0, %s47
    %s50 = sphi 0, %s49
    %s64 = sphi 0, %s50
    %s68 = sphi 0, %s68
    %s70 = sphi 0, %s68
    %s71 = sphi 0, %s70
    %s85 = sphi 0, %s71
    %s89 = sphi 0, %s89
    %s91 = sphi 0, %s89
    %s92 = sphi 0, %s91
    %s106 = sphi 0, %s92
    %s110 = sphi 0, %s110
    %s112 = sphi 0, %s110
    %s113 = sphi 0, %s112
    %s127 = sphi 0, %s113
    %s131 = sphi 0, %s131
    %s133 = sphi 0, %s131
    %s134 = sphi 0, %s133
    %s148 = sphi 0, %s134
    %s152 = sphi 0, %s152
    %s154 = sphi 0, %s152
    %s155 = sphi 0, %s154
    %s169 = sphi 0, %s155
    %s175 = sphi 0, %s177
    %s178 = sphi 0, %s175
    %s179 = sphi 0, %s178
    %s195 = sphi 0, %s179
  $region4: #{tpu_custom_call.1} parent=0 // loop_header_branch
    %16 = sbr.rel (%p14) target = $region8
  $region5: #{tpu_custom_call.1} parent=0 // loop_body
    %s18 = ssub.s32 %s13, 1
    %s19 = ssub.s32 %s13, 2
    %s20 = sadd.s32 %s13, 1
    %s21 = ssub.s32 %s13, %s20
    %p22 = scmp.eq.s32.totalorder %s21, 0
    %s24 = sadd.s32 %s23, 1
    %s25 = scalar_select %p22, %s23, %s24
    %p28 = pneg %p22
    %p29 = scmp.eq.s32.totalorder %s13, 2
    %p30 = por %p28, %p29
    %p31 = scmp.ne.s32.totalorder %s23, %s26
    %p32 = scmp.eq.s32.totalorder %s13, 0
    %p33 = por %p31, %p32
    %p34 = scmp.ne.s32.totalorder %s23, %s26
    %p35 = scmp.eq.s32.totalorder %s18, 2
    %p36 = por %p34, %p35
    %p37 = scmp.ne.s32.totalorder %s26, %s27
    %p38 = scmp.eq.s32.totalorder %s18, 0
    %p39 = por %p37, %p38
    %p40 = scmp.ne.s32.totalorder %s26, %s27
    %p41 = scmp.eq.s32.totalorder %s19, 2
    %p42 = por %p40, %p41
    %p44 = scmp.ne.s32.totalorder %s27, %s43
    %p45 = scmp.eq.s32.totalorder %s19, 0
    %p46 = por %p44, %p45
    %s48 = sadd.s32 %s47, 1
    %p51 = scmp.eq.s32.totalorder %s13, 2
    %p52 = scmp.ne.s32.totalorder %s47, %s49
    %p53 = scmp.eq.s32.totalorder %s13, 0
    %p54 = por %p52, %p53
    %p55 = scmp.ne.s32.totalorder %s47, %s49
    %p56 = scmp.eq.s32.totalorder %s18, 2
    %p57 = por %p55, %p56
    %p58 = scmp.ne.s32.totalorder %s49, %s50
    %p59 = scmp.eq.s32.totalorder %s18, 0
    %p60 = por %p58, %p59
    %p61 = scmp.ne.s32.totalorder %s49, %s50
    %p62 = scmp.eq.s32.totalorder %s19, 2
    %p63 = por %p61, %p62
    %p65 = scmp.ne.s32.totalorder %s50, %s64
    %p66 = scmp.eq.s32.totalorder %s19, 0
    %p67 = por %p65, %p66
    %s69 = sadd.s32 %s68, 1
    %p72 = scmp.eq.s32.totalorder %s13, 2
    %p73 = scmp.ne.s32.totalorder %s68, %s70
    %p74 = scmp.eq.s32.totalorder %s13, 0
    %p75 = por %p73, %p74
    %p76 = scmp.ne.s32.totalorder %s68, %s70
    %p77 = scmp.eq.s32.totalorder %s18, 2
    %p78 = por %p76, %p77
    %p79 = scmp.ne.s32.totalorder %s70, %s71
    %p80 = scmp.eq.s32.totalorder %s18, 0
    %p81 = por %p79, %p80
    %p82 = scmp.ne.s32.totalorder %s70, %s71
    %p83 = scmp.eq.s32.totalorder %s19, 2
    %p84 = por %p82, %p83
    %p86 = scmp.ne.s32.totalorder %s71, %s85
    %p87 = scmp.eq.s32.totalorder %s19, 0
    %p88 = por %p86, %p87
    %s90 = sadd.s32 %s89, 1
    %p93 = scmp.eq.s32.totalorder %s13, 2
    %p94 = scmp.ne.s32.totalorder %s89, %s91
    %p95 = scmp.eq.s32.totalorder %s13, 0
    %p96 = por %p94, %p95
    %p97 = scmp.ne.s32.totalorder %s89, %s91
    %p98 = scmp.eq.s32.totalorder %s18, 2
    %p99 = por %p97, %p98
    %p100 = scmp.ne.s32.totalorder %s91, %s92
    %p101 = scmp.eq.s32.totalorder %s18, 0
    %p102 = por %p100, %p101
    %p103 = scmp.ne.s32.totalorder %s91, %s92
    %p104 = scmp.eq.s32.totalorder %s19, 2
    %p105 = por %p103, %p104
    %p107 = scmp.ne.s32.totalorder %s92, %s106
    %p108 = scmp.eq.s32.totalorder %s19, 0
    %p109 = por %p107, %p108
    %s111 = sadd.s32 %s110, 1
    %p114 = scmp.eq.s32.totalorder %s13, 2
    %p115 = scmp.ne.s32.totalorder %s110, %s112
    %p116 = scmp.eq.s32.totalorder %s13, 0
    %p117 = por %p115, %p116
    %p118 = scmp.ne.s32.totalorder %s110, %s112
    %p119 = scmp.eq.s32.totalorder %s18, 2
    %p120 = por %p118, %p119
    %p121 = scmp.ne.s32.totalorder %s112, %s113
    %p122 = scmp.eq.s32.totalorder %s18, 0
    %p123 = por %p121, %p122
    %p124 = scmp.ne.s32.totalorder %s112, %s113
    %p125 = scmp.eq.s32.totalorder %s19, 2
    %p126 = por %p124, %p125
    %p128 = scmp.ne.s32.totalorder %s113, %s127
    %p129 = scmp.eq.s32.totalorder %s19, 0
    %p130 = por %p128, %p129
    %s132 = sadd.s32 %s131, 1
    %p135 = scmp.eq.s32.totalorder %s13, 2
    %p136 = scmp.ne.s32.totalorder %s131, %s133
    %p137 = scmp.eq.s32.totalorder %s13, 0
    %p138 = por %p136, %p137
    %p139 = scmp.ne.s32.totalorder %s131, %s133
    %p140 = scmp.eq.s32.totalorder %s18, 2
    %p141 = por %p139, %p140
    %p142 = scmp.ne.s32.totalorder %s133, %s134
    %p143 = scmp.eq.s32.totalorder %s18, 0
    %p144 = por %p142, %p143
    %p145 = scmp.ne.s32.totalorder %s133, %s134
    %p146 = scmp.eq.s32.totalorder %s19, 2
    %p147 = por %p145, %p146
    %p149 = scmp.ne.s32.totalorder %s134, %s148
    %p150 = scmp.eq.s32.totalorder %s19, 0
    %p151 = por %p149, %p150
    %s153 = sadd.s32 %s152, 1
    %p156 = scmp.eq.s32.totalorder %s13, 2
    %p157 = scmp.ne.s32.totalorder %s152, %s154
    %p158 = scmp.eq.s32.totalorder %s13, 0
    %p159 = por %p157, %p158
    %p160 = scmp.ne.s32.totalorder %s152, %s154
    %p161 = scmp.eq.s32.totalorder %s18, 2
    %p162 = por %p160, %p161
    %p163 = scmp.ne.s32.totalorder %s154, %s155
    %p164 = scmp.eq.s32.totalorder %s18, 0
    %p165 = por %p163, %p164
    %p166 = scmp.ne.s32.totalorder %s154, %s155
    %p167 = scmp.eq.s32.totalorder %s19, 2
    %p168 = por %p166, %p167
    %p170 = scmp.ne.s32.totalorder %s155, %s169
    %p171 = scmp.eq.s32.totalorder %s19, 0
    %p172 = por %p170, %p171
    %s173 = ssub.s32 %s13, %s20
    %p174 = scmp.eq.s32.totalorder %s173, 0
    %s176 = sadd.s32 %s175, 1
    %s177 = scalar_select %p174, %s175, %s176
    %p180 = pneg %p174
    %p181 = scmp.eq.s32.totalorder %s13, 2
    %p182 = por %p180, %p181
    %p183 = scmp.ne.s32.totalorder %s175, %s178
    %p184 = scmp.eq.s32.totalorder %s13, 0
    %p185 = por %p183, %p184
    %p186 = scmp.ne.s32.totalorder %s175, %s178
    %p187 = scmp.eq.s32.totalorder %s18, 2
    %p188 = por %p186, %p187
    %p189 = scmp.ne.s32.totalorder %s178, %s179
    %p190 = scmp.eq.s32.totalorder %s18, 0
    %p191 = por %p189, %p190
    %p192 = scmp.ne.s32.totalorder %s178, %s179
    %p193 = scmp.eq.s32.totalorder %s19, 2
    %p194 = por %p192, %p193
    %p196 = scmp.ne.s32.totalorder %s179, %s195
    %p197 = scmp.eq.s32.totalorder %s19, 0
    %p198 = por %p196, %p197
    %p199 = scmp.le.s32.totalorder 1, %s13
    %p200 = scmp.lt.s32.totalorder %s13, 4
    %p201 = pnand %p199, %p200
    %p202 = pneg %p201
    // Predicated region
    $region9: #{tpu_custom_call.1} parent=5 // pred_check
      _
    $region10: #{tpu_custom_call.1} parent=5 // pred_check_branch
      %204 = sbr.rel (%p201) target = $region12
    $region11: #{tpu_custom_call.1} parent=5 // pred_region
      %s205 = ssub.s32 %s13, 1
      // Predicated region
      $region13: #{tpu_custom_call.1} parent=11 // pred_check
        %p206 = pneg %p60
      $region14: #{tpu_custom_call.1} parent=11 // pred_check_branch
        %208 = sbr.rel (%p206) target = $region16
      $region15: #{tpu_custom_call.1} parent=11 // pred_region
        _
      $region16: #{tpu_custom_call.1} parent=11 // pred_fallthru
        _
      // Predicated region
      $region17: #{tpu_custom_call.1} parent=11 // pred_check
        %p209 = pneg %p81
      $region18: #{tpu_custom_call.1} parent=11 // pred_check_branch
        %211 = sbr.rel (%p209) target = $region20
      $region19: #{tpu_custom_call.1} parent=11 // pred_region
        _
      $region20: #{tpu_custom_call.1} parent=11 // pred_fallthru
        _
      // Predicated region
      $region21: #{tpu_custom_call.1} parent=11 // pred_check
        %p212 = pneg %p102
      $region22: #{tpu_custom_call.1} parent=11 // pred_check_branch
        %214 = sbr.rel (%p212) target = $region24
      $region23: #{tpu_custom_call.1} parent=11 // pred_region
        _
      $region24: #{tpu_custom_call.1} parent=11 // pred_fallthru
        _
      // Predicated region
      $region25: #{tpu_custom_call.1} parent=11 // pred_check
        %p215 = pneg %p123
      $region26: #{tpu_custom_call.1} parent=11 // pred_check_branch
        %217 = sbr.rel (%p215) target = $region28
      $region27: #{tpu_custom_call.1} parent=11 // pred_region
        _
      $region28: #{tpu_custom_call.1} parent=11 // pred_fallthru
        _
      // Predicated region
      $region29: #{tpu_custom_call.1} parent=11 // pred_check
        %p218 = pneg %p144
      $region30: #{tpu_custom_call.1} parent=11 // pred_check_branch
        %220 = sbr.rel (%p218) target = $region32
      $region31: #{tpu_custom_call.1} parent=11 // pred_region
        _
      $region32: #{tpu_custom_call.1} parent=11 // pred_fallthru
        _
      // Predicated region
      $region33: #{tpu_custom_call.1} parent=11 // pred_check
        %p221 = pneg %p165
      $region34: #{tpu_custom_call.1} parent=11 // pred_check_branch
        %223 = sbr.rel (%p221) target = $region36
      $region35: #{tpu_custom_call.1} parent=11 // pred_region
        _
      $region36: #{tpu_custom_call.1} parent=11 // pred_fallthru
        _
    $region12: #{tpu_custom_call.1} parent=5 // pred_fallthru
      _
    %p224 = scmp.lt.s32.totalorder %s13, 3
    // Predicated region
    $region37: #{tpu_custom_call.1} parent=5 // pred_check
      %p225 = pneg %p224
    $region38: #{tpu_custom_call.1} parent=5 // pred_check_branch
      %227 = sbr.rel (%p225) target = $region40
    $region39: #{tpu_custom_call.1} parent=5 // pred_region
      // Predicated region
      $region41: #{tpu_custom_call.1} parent=39 // pred_check
        %p228 = pneg %p33
      $region42: #{tpu_custom_call.1} parent=39 // pred_check_branch
        %230 = sbr.rel (%p228) target = $region44
      $region43: #{tpu_custom_call.1} parent=39 // pred_region
        %s231 = smul.u32 2, %s13
        %p232 = scmp.lt.s32.totalorder %s231, 5
        %s233 = scalar_select %p232, %s231, 5
        %s234 = smul.addr %s233, 4
        %s235 = scalar_lea.vmem %s0, %s234
        %s236 = smul.u32 2, %s13
      $region44: #{tpu_custom_call.1} parent=39 // pred_fallthru
        _
    $region40: #{tpu_custom_call.1} parent=5 // pred_fallthru
      _
    %p237 = scmp.le.s32.totalorder 1, %s13
    %p238 = scmp.lt.s32.totalorder %s13, 4
    %p239 = pnand %p237, %p238
    %p240 = pneg %p239
    // Predicated region
    $region45: #{tpu_custom_call.1} parent=5 // pred_check
      _
    $region46: #{tpu_custom_call.1} parent=5 // pred_check_branch
      %242 = sbr.rel (%p239) target = $region48
    $region47: #{tpu_custom_call.1} parent=5 // pred_region
      %s243 = ssub.s32 %s13, 1
      %s244 = smul.u32 2, %s18
      %p245 = scmp.lt.s32.totalorder %s244, 5
      %s246 = scalar_select %p245, %s244, 5
      %s247 = smul.addr %s246, 4
      %s248 = scalar_lea.vmem %s0, %s247
      %p249 = pneg %p39
      %p250 = pneg %p36
      %p251 = pneg %p60
      %p252 = pneg %p57
      %p253 = pneg %p81
      %p254 = pneg %p78
      %p255 = pneg %p102
      %p256 = pneg %p99
      %p257 = pneg %p123
      %p258 = pneg %p120
      %p259 = pneg %p144
      %p260 = pneg %p141
      %p261 = pneg %p165
      %p262 = pneg %p162
      %p263 = pneg %p191
      %p264 = pneg %p188
      %s265 = smul.u32 2, %s18
      %p266 = scmp.lt.s32.totalorder %s265, 5
      %s267 = scalar_select %p266, %s265, 5
      %s268 = smul.addr %s267, 8
      %s269 = scalar_lea.vmem %s7, %s268
      %s270 = smul.u32 2, %s18
      %p271 = scmp.lt.s32.totalorder %s270, 5
      %s272 = scalar_select %p271, %s270, 5
      %s273 = smul.addr %s272, 4
      %s274 = scalar_lea.vmem %s0, %s273
      %s275 = smul.u32 2, %s18
      %s276 = smul.u32 2, %s18
      %p277 = scmp.lt.s32.totalorder %s276, 5
      %s278 = scalar_select %p277, %s276, 5
      %s279 = smul.addr %s278, 8
      %s280 = scalar_lea.vmem %s7, %s279
      %s281 = smul.u32 2, %s18
      %v283 = vld [vmem:[%s274] sm:$0xf]
      %v284 = vld [vmem:[%s274 + $0x4] sm:$0xf]
      %v285 = vld [vmem:[%s1] sm:$0xf]
      %v286 = vld [vmem:[%s1 + $0x4] sm:$0xf]
      %v287 = vld [vmem:[%s1 + $0x8] sm:$0xf]
      %v288 = vld [vmem:[%s1 + $0xc] sm:$0xf]
      %v289 = vld [vmem:[%s2] sm:$0x1]
      %v291 = vlaneseq
      %v292 = vshrl.u32 %v291, 7
      %v293 = vsub.s32 0, %v292
      %v294 = vrot.slane %v289, %v293
      %v298 = vunpack.c.l.b16 %v283
      %v299 = vunpack.c.l.b16 %v284
      %v300 = vpack.c.b16 %v299, %v298
      %v305 = vunpack.c.l.b16 %v285
      %v306 = vunpack.c.l.b16 %v286
      %v307 = vunpack.c.l.b16 %v287
      %v308 = vunpack.c.l.b16 %v288
      %v309 = vpack.c.b16 %v306, %v305
      %v310 = vpack.c.b16 %v308, %v307
      %vm313 = vcmask 261120
      %v315 = vsel %vm313, %v300, 0
      %317 = vmatprep.subr.bf16.mxu0 0
      %318 = vmatpush1.bf16.msra.mxu0 %v309
      %319 = vmatprep.subr.bf16.mxu0 0
      %320 = vmatpush1.bf16.msra.mxu0 %v310
      %321 = vmatprep.subr.bf16.mxu0 0
      %322 = vmatpush1.bf16.msra.mxu0 0
      %323 = vmatprep.subr.bf16.mxu0 0
      %324 = vmatpush1.bf16.msra.mxu0 0
      %325 = vmatprep.subr.bf16.mxu0 0
      %326 = vmatpush1.bf16.msra.mxu0 0
      %327 = vmatprep.subr.bf16.mxu0 0
      %328 = vmatpush1.bf16.msra.mxu0 0
      %329 = vmatprep.subr.bf16.mxu0 0
      %330 = vmatpush1.bf16.msra.mxu0 0
      %331 = vmatprep.subr.bf16.mxu0 0
      %332 = vmatpush1.bf16.msra.mxu0 0
      %333 = vmatprep.subr.bf16.mxu0 0
      %334 = vmatpush1.bf16.msra.mxu0 0
      %335 = vmatprep.subr.bf16.mxu0 0
      %336 = vmatpush1.bf16.msra.mxu0 0
      %337 = vmatprep.subr.bf16.mxu0 0
      %338 = vmatpush1.bf16.msra.mxu0 0
      %339 = vmatprep.subr.bf16.mxu0 0
      %340 = vmatpush1.bf16.msra.mxu0 0
      %341 = vmatprep.subr.bf16.mxu0 0
      %342 = vmatpush1.bf16.msra.mxu0 0
      %343 = vmatprep.subr.bf16.mxu0 0
      %344 = vmatpush1.bf16.msra.mxu0 0
      %345 = vmatprep.subr.bf16.mxu0 0
      %346 = vmatpush1.bf16.msra.mxu0 0
      %347 = vmatprep.subr.bf16.mxu0 0
      %348 = vmatpush1.bf16.msra.mxu0 0
      %349 = vmatprep.mubr.bf16.mxu0 0
      %350 = vmatmul.mubr.bf16.gmra.mrb[0].mxu0 %v315
      %v351 = vpop.f32.mrb[0].mxu0
      %v352 = vadd.f32 %v294, %v351
      %v353 = vpop.f32.mrb[0].mxu0
      %v354 = vpop.f32.mrb[0].mxu0
      %v355 = vadd.f32 %v294, %v354
      %v356 = vpop.f32.mrb[0].mxu0
      %357 = vdwg.mxu0
      %v358 = vmax.f32 %v352, 0.0
      %v359 = vmax.f32 %v355, 0.0
      %v360 = vld [vmem:[%s3] sm:$0xf]
      %v361 = vld [vmem:[%s3 + $0x4] sm:$0xf]
      %v362 = vld [vmem:[%s3 + $0x8] sm:$0xf]
      %v363 = vld [vmem:[%s3 + $0xc] sm:$0xf]
      %v364 = vld [vmem:[%s3 + $0x10] sm:$0xf]
      %v365 = vld [vmem:[%s3 + $0x14] sm:$0xf]
      %v366 = vld [vmem:[%s3 + $0x18] sm:$0xf]
      %v367 = vld [vmem:[%s3 + $0x1c] sm:$0xf]
      %v368 = vld [vmem:[%s3 + $0x20] sm:$0xf]
      %v369 = vld [vmem:[%s3 + $0x24] sm:$0xf]
      %v370 = vld [vmem:[%s3 + $0x28] sm:$0xf]
      %v371 = vld [vmem:[%s3 + $0x2c] sm:$0xf]
      %v372 = vld [vmem:[%s3 + $0x30] sm:$0xf]
      %v373 = vld [vmem:[%s3 + $0x34] sm:$0xf]
      %v374 = vld [vmem:[%s3 + $0x38] sm:$0xf]
      %v375 = vld [vmem:[%s3 + $0x3c] sm:$0xf]
      %v376 = vpack.c.bf16 %v359, %v358
      %v377 = vld [vmem:[%s4] sm:$0x1]
      %v379 = vlaneseq
      %v380 = vshrl.u32 %v379, 7
      %v381 = vsub.s32 0, %v380
      %v382 = vrot.slane %v377, %v381
      %v400 = vunpack.c.l.b16 %v360
      %v401 = vunpack.c.l.b16 %v361
      %v402 = vunpack.c.l.b16 %v362
      %v403 = vunpack.c.l.b16 %v363
      %v404 = vunpack.c.l.b16 %v364
      %v405 = vunpack.c.l.b16 %v365
      %v406 = vunpack.c.l.b16 %v366
      %v407 = vunpack.c.l.b16 %v367
      %v408 = vunpack.c.l.b16 %v368
      %v409 = vunpack.c.l.b16 %v369
      %v410 = vunpack.c.l.b16 %v370
      %v411 = vunpack.c.l.b16 %v371
      %v412 = vunpack.c.l.b16 %v372
      %v413 = vunpack.c.l.b16 %v373
      %v414 = vunpack.c.l.b16 %v374
      %v415 = vunpack.c.l.b16 %v375
      %v416 = vpack.c.b16 %v401, %v400
      %v417 = vpack.c.b16 %v403, %v402
      %v418 = vpack.c.b16 %v405, %v404
      %v419 = vpack.c.b16 %v407, %v406
      %v420 = vpack.c.b16 %v409, %v408
      %v421 = vpack.c.b16 %v411, %v410
      %v422 = vpack.c.b16 %v413, %v412
      %v423 = vpack.c.b16 %v415, %v414
      %432 = vmatprep.subr.bf16.mxu0 0
      %433 = vmatpush1.bf16.msra.mxu0 %v416
      %434 = vmatprep.subr.bf16.mxu0 0
      %435 = vmatpush1.bf16.msra.mxu0 %v417
      %436 = vmatprep.subr.bf16.mxu0 0
      %437 = vmatpush1.bf16.msra.mxu0 %v418
      %438 = vmatprep.subr.bf16.mxu0 0
      %439 = vmatpush1.bf16.msra.mxu0 %v419
      %440 = vmatprep.subr.bf16.mxu0 0
      %441 = vmatpush1.bf16.msra.mxu0 %v420
      %442 = vmatprep.subr.bf16.mxu0 0
      %443 = vmatpush1.bf16.msra.mxu0 %v421
      %444 = vmatprep.subr.bf16.mxu0 0
      %445 = vmatpush1.bf16.msra.mxu0 %v422
      %446 = vmatprep.subr.bf16.mxu0 0
      %447 = vmatpush1.bf16.msra.mxu0 %v423
      %448 = vmatprep.subr.bf16.mxu0 0
      %449 = vmatpush1.bf16.msra.mxu0 0
      %450 = vmatprep.subr.bf16.mxu0 0
      %451 = vmatpush1.bf16.msra.mxu0 0
      %452 = vmatprep.subr.bf16.mxu0 0
      %453 = vmatpush1.bf16.msra.mxu0 0
      %454 = vmatprep.subr.bf16.mxu0 0
      %455 = vmatpush1.bf16.msra.mxu0 0
      %456 = vmatprep.subr.bf16.mxu0 0
      %457 = vmatpush1.bf16.msra.mxu0 0
      %458 = vmatprep.subr.bf16.mxu0 0
      %459 = vmatpush1.bf16.msra.mxu0 0
      %460 = vmatprep.subr.bf16.mxu0 0
      %461 = vmatpush1.bf16.msra.mxu0 0
      %462 = vmatprep.subr.bf16.mxu0 0
      %463 = vmatpush1.bf16.msra.mxu0 0
      %464 = vmatprep.mubr.bf16.mxu0 0
      %465 = vmatmul.mubr.bf16.gmra.mrb[0].mxu0 %v376
      %v466 = vpop.f32.mrb[0].mxu0
      %v467 = vadd.f32 %v382, %v466
      %v468 = vpop.f32.mrb[0].mxu0
      %v469 = vpop.f32.mrb[0].mxu0
      %v470 = vadd.f32 %v382, %v469
      %v471 = vpop.f32.mrb[0].mxu0
      %472 = vdwg.mxu0
      %v473 = vmax.f32 %v467, 0.0
      %v474 = vmax.f32 %v470, 0.0
      %v475 = vld [vmem:[%s5] sm:$0xf]
      %v476 = vld [vmem:[%s5 + $0x4] sm:$0xf]
      %v477 = vld [vmem:[%s5 + $0x8] sm:$0xf]
      %v478 = vld [vmem:[%s5 + $0xc] sm:$0xf]
      %v479 = vld [vmem:[%s5 + $0x10] sm:$0xf]
      %v480 = vld [vmem:[%s5 + $0x14] sm:$0xf]
      %v481 = vld [vmem:[%s5 + $0x18] sm:$0xf]
      %v482 = vld [vmem:[%s5 + $0x1c] sm:$0xf]
      %v483 = vld [vmem:[%s5 + $0x20] sm:$0xf]
      %v484 = vld [vmem:[%s5 + $0x24] sm:$0xf]
      %v485 = vld [vmem:[%s5 + $0x28] sm:$0xf]
      %v486 = vld [vmem:[%s5 + $0x2c] sm:$0xf]
      %v487 = vld [vmem:[%s5 + $0x30] sm:$0xf]
      %v488 = vld [vmem:[%s5 + $0x34] sm:$0xf]
      %v489 = vld [vmem:[%s5 + $0x38] sm:$0xf]
      %v490 = vld [vmem:[%s5 + $0x3c] sm:$0xf]
      %v491 = vpack.c.bf16 %v474, %v473
      %v492 = vld [vmem:[%s6] sm:$0x1]
      %v494 = vlaneseq
      %v495 = vshrl.u32 %v494, 7
      %v496 = vsub.s32 0, %v495
      %v497 = vrot.slane %v492, %v496
      %v515 = vunpack.c.l.b16 %v475
      %v516 = vunpack.c.l.b16 %v476
      %v517 = vunpack.c.l.b16 %v477
      %v518 = vunpack.c.l.b16 %v478
      %v519 = vunpack.c.l.b16 %v479
      %v520 = vunpack.c.l.b16 %v480
      %v521 = vunpack.c.l.b16 %v481
      %v522 = vunpack.c.l.b16 %v482
      %v523 = vunpack.c.l.b16 %v483
      %v524 = vunpack.c.l.b16 %v484
      %v525 = vunpack.c.l.b16 %v485
      %v526 = vunpack.c.l.b16 %v486
      %v527 = vunpack.c.l.b16 %v487
      %v528 = vunpack.c.l.b16 %v488
      %v529 = vunpack.c.l.b16 %v489
      %v530 = vunpack.c.l.b16 %v490
      %v531 = vpack.c.b16 %v516, %v515
      %v532 = vpack.c.b16 %v518, %v517
      %v533 = vpack.c.b16 %v520, %v519
      %v534 = vpack.c.b16 %v522, %v521
      %v535 = vpack.c.b16 %v524, %v523
      %v536 = vpack.c.b16 %v526, %v525
      %v537 = vpack.c.b16 %v528, %v527
      %v538 = vpack.c.b16 %v530, %v529
      %547 = vmatprep.subr.bf16.mxu0 0
      %548 = vmatpush1.bf16.msra.mxu0 %v531
      %549 = vmatprep.subr.bf16.mxu0 0
      %550 = vmatpush1.bf16.msra.mxu0 %v532
      %551 = vmatprep.subr.bf16.mxu0 0
      %552 = vmatpush1.bf16.msra.mxu0 %v533
      %553 = vmatprep.subr.bf16.mxu0 0
      %554 = vmatpush1.bf16.msra.mxu0 %v534
      %555 = vmatprep.subr.bf16.mxu0 0
      %556 = vmatpush1.bf16.msra.mxu0 %v535
      %557 = vmatprep.subr.bf16.mxu0 0
      %558 = vmatpush1.bf16.msra.mxu0 %v536
      %559 = vmatprep.subr.bf16.mxu0 0
      %560 = vmatpush1.bf16.msra.mxu0 %v537
      %561 = vmatprep.subr.bf16.mxu0 0
      %562 = vmatpush1.bf16.msra.mxu0 %v538
      %563 = vmatprep.subr.bf16.mxu0 0
      %564 = vmatpush1.bf16.msra.mxu0 0
      %565 = vmatprep.subr.bf16.mxu0 0
      %566 = vmatpush1.bf16.msra.mxu0 0
      %567 = vmatprep.subr.bf16.mxu0 0
      %568 = vmatpush1.bf16.msra.mxu0 0
      %569 = vmatprep.subr.bf16.mxu0 0
      %570 = vmatpush1.bf16.msra.mxu0 0
      %571 = vmatprep.subr.bf16.mxu0 0
      %572 = vmatpush1.bf16.msra.mxu0 0
      %573 = vmatprep.subr.bf16.mxu0 0
      %574 = vmatpush1.bf16.msra.mxu0 0
      %575 = vmatprep.subr.bf16.mxu0 0
      %576 = vmatpush1.bf16.msra.mxu0 0
      %577 = vmatprep.subr.bf16.mxu0 0
      %578 = vmatpush1.bf16.msra.mxu0 0
      %579 = vmatprep.mubr.bf16.mxu0 0
      %580 = vmatmul.mubr.bf16.gmra.mrb[0].mxu0 %v491
      %v581 = vpop.f32.mrb[0].mxu0
      %v582 = vadd.f32 %v497, %v581
      %v583 = vpop.f32.mrb[0].mxu0
      %v584 = vpop.f32.mrb[0].mxu0
      %v585 = vadd.f32 %v497, %v584
      %v586 = vpop.f32.mrb[0].mxu0
      %587 = vdwg.mxu0
      %vm588 = vcmask 130048
      %589 = vst.msk [vmem:[%s280] sm:$0xff] %vm588, %v582
      %590 = vst.msk [vmem:[%s280 + $0x8] sm:$0xff] %vm588, %v585
      %s591 = smul.u32 2, %s18
      %p592 = scmp.lt.s32.totalorder %s591, 5
      %s593 = scalar_select %p592, %s591, 5
      %s594 = smul.addr %s593, 8
      %s595 = scalar_lea.vmem %s7, %s594
      // Predicated region
      $region49: #{tpu_custom_call.1} parent=47 // pred_check
        %p596 = pneg %p188
      $region50: #{tpu_custom_call.1} parent=47 // pred_check_branch
        %598 = sbr.rel (%p596) target = $region52
      $region51: #{tpu_custom_call.1} parent=47 // pred_region
        %s599 = smul.u32 2, %s18
      $region52: #{tpu_custom_call.1} parent=47 // pred_fallthru
        _
    $region48: #{tpu_custom_call.1} parent=5 // pred_fallthru
      _
    %p600 = scmp.le.s32.totalorder 2, %s13
    // Predicated region
    $region53: #{tpu_custom_call.1} parent=5 // pred_check
      %p601 = pneg %p600
    $region54: #{tpu_custom_call.1} parent=5 // pred_check_branch
      %603 = sbr.rel (%p601) target = $region56
    $region55: #{tpu_custom_call.1} parent=5 // pred_region
      %s604 = ssub.s32 %s13, 2
      // Predicated region
      $region57: #{tpu_custom_call.1} parent=55 // pred_check
        %p605 = pneg %p194
      $region58: #{tpu_custom_call.1} parent=55 // pred_check_branch
        %607 = sbr.rel (%p605) target = $region60
      $region59: #{tpu_custom_call.1} parent=55 // pred_region
        %s608 = smul.u32 2, %s19
        %p609 = scmp.lt.s32.totalorder %s608, 5
        %s610 = scalar_select %p609, %s608, 5
        %s611 = smul.addr %s610, 8
        %s612 = scalar_lea.vmem %s7, %s611
      $region60: #{tpu_custom_call.1} parent=55 // pred_fallthru
        _
    $region56: #{tpu_custom_call.1} parent=5 // pred_fallthru
      _
  $region6: #{tpu_custom_call.1} parent=0 // loop_footer
    %s17 = sadd.s32 1, %s13
  $region7: #{tpu_custom_call.1} parent=0 // loop_footer_branch
    %12 = sbr.rel target = $region3
  $region8: #{tpu_custom_call.1} parent=0 // loop_exit
    _

</llo_original>
